<compile_context>
chip_gen: v7x
topology: tpu7x:2x2x1
jax: 0.10.0
libtpu: 0.0.40
codegen_flags: <defaults>
</compile_context>

<pallas_src>
import jax
import jax.numpy as jnp
from jax.experimental import pallas as pl
from jax.experimental.pallas import tpu as pltpu


def _round_up(x, m):
    return (x + m - 1) // m * m


def _cast(a, dt):
    return a if a.dtype == dt else a.astype(dt)


def _dddqn_kernel(x_ref, w1_ref, w2_ref, wq_ref, b_ref, q_ref):
    """One (model, batch-tile) grid step: fc1+ReLU, fc2+ReLU, fused dueling head."""
    x = x_ref[...]                 # (bm, in_dim)        f32
    w1 = w1_ref[0]                 # (in_dim, h1_pad)    dot dtype (bf16 or f32)
    w2 = w2_ref[0]                 # (h1_pad, h2_pad)
    wq = wq_ref[0]                 # (h2_pad, n_pad)     dueling combine pre-folded
    b = b_ref[0]                   # (3, w_max)          f32 packed biases

    h1_pad = w1_ref.shape[2]
    h2_pad = w2_ref.shape[2]
    n_pad = wq_ref.shape[2]

    # all widths are multiples of 128 -> lane-aligned slices of the bias pack
    b1 = b[0:1, :h1_pad]
    b2 = b[1:2, :h2_pad]
    bq = b[2:3, :n_pad]

    dt = w1.dtype

    # fc1 + ReLU  (bias add / ReLU kept in f32 -- v5e has no bf16 VPU path)
    h1 = jnp.dot(_cast(x, dt), w1, preferred_element_type=jnp.float32) + b1
    h1 = jnp.maximum(h1, 0.0)

    # fc2 + ReLU
    h2 = jnp.dot(_cast(h1, dt), w2, preferred_element_type=jnp.float32) + b2
    h2 = jnp.maximum(h2, 0.0)

    # fused dueling head: q = h2 @ Wq + bq directly (v + adv - mean(adv) is
    # folded into Wq/bq in the wrapper).  Padded columns of Wq/bq are zero;
    # the wrapper slices them off.
    q = jnp.dot(_cast(h2, dt), wq, preferred_element_type=jnp.float32) + bq
    q_ref[0] = q.astype(q_ref.dtype)


def _pack_model(params, model, n_actions, dot_dtype):
    """Fold the dueling combine into the head, pad to lane-dense widths, pack biases."""
    w1 = params[f"{model}/w1"]; b1 = params[f"{model}/b1"]
    w2 = params[f"{model}/w2"]; b2 = params[f"{model}/b2"]
    wv = params[f"{model}/wv"]; bv = params[f"{model}/bv"]
    wa = params[f"{model}/wa"]; ba = params[f"{model}/ba"]

    in_dim, h1 = w1.shape
    h2 = w2.shape[1]
    h1_pad = _round_up(h1, 128)
    h2_pad = _round_up(h2, 128)
    n_pad = _round_up(n_actions, 128)
    w_max = max(h1_pad, h2_pad, n_pad)

    # dueling fold (done in f32, cast once at the end):
    #   q = h2 @ Wq + bq  with  Wq[:, j] = Wa[:, j] + Wv - mean_k Wa[:, k]
    #                           bq[j]    = ba[j]    + bv - mean_k ba[k]
    wq = wa + wv - jnp.mean(wa, axis=1, keepdims=True)       # (h2, n_actions)
    bq = ba + bv - jnp.mean(ba, axis=1, keepdims=True)       # (1, n_actions)

    # zero-pad hidden / head widths to lane-dense multiples of 128
    w1_p = jnp.zeros((in_dim, h1_pad), jnp.float32).at[:, :h1].set(w1)
    w2_p = jnp.zeros((h1_pad, h2_pad), jnp.float32).at[:h1, :h2].set(w2)
    wq_p = jnp.zeros((h2_pad, n_pad), jnp.float32).at[:h2, :n_actions].set(wq)

    # pack the three bias rows into a single (3, w_max) f32 array -> one DMA.
    b_pack = jnp.zeros((3, w_max), jnp.float32)
    b_pack = b_pack.at[0, :h1].set(b1[0])
    b_pack = b_pack.at[1, :h2].set(b2[0])
    b_pack = b_pack.at[2, :n_actions].set(bq[0])

    return (_cast(w1_p, dot_dtype), _cast(w2_p, dot_dtype),
            _cast(wq_p, dot_dtype), b_pack)


def dddqn_forward_multi(state, params, models=("online", "target"), *,
                        dot_dtype=jnp.bfloat16, batch_tile=512,
                        out_dtype=jnp.float32):
    """Fused Policy_DDDQN forward for one or more weight sets in ONE pallas_call.

    state:  (B, input_dim) float32
    params: dict with keys f"{model}/{w1,b1,w2,b2,wv,bv,wa,ba}"
    returns q of shape (len(models), B, n_actions), dtype out_dtype.

    Note on dot_dtype: bf16 is the right default on v6e/v7x (256-wide MXU);
    on v5e the MXU is never the bottleneck at these sizes, so dot_dtype=f32
    is a wash or slightly faster and gives exact-precision results.
    """
    n_actions = params[f"{models[0]}/wa"].shape[1]
    packed = [_pack_model(params, m, n_actions, dot_dtype) for m in models]
    w1_s = jnp.stack([p[0] for p in packed])   # (M, in_dim, h1_pad)
    w2_s = jnp.stack([p[1] for p in packed])   # (M, h1_pad, h2_pad)
    wq_s = jnp.stack([p[2] for p in packed])   # (M, h2_pad, n_pad)
    b_s = jnp.stack([p[3] for p in packed])    # (M, 3, w_max)

    M = len(models)
    B, in_dim = state.shape
    h1_pad = w1_s.shape[2]
    h2_pad = w2_s.shape[2]
    n_pad = wq_s.shape[2]
    w_max = b_s.shape[2]

    # Batch tiling: weights stay VMEM-resident per model; (bm, in_dim) state
    # tiles and (bm, n_pad) q tiles stream.  The state is re-read once per
    # model (grid order M outer, batch inner) -- negligible for M<=2.
    b_rounded = _round_up(B, 8)
    bm = min(batch_tile, b_rounded)
    if M == 1 and b_rounded >= 16 and bm == b_rounded:
        # Single-model call: split the batch so the parallel grid has >= 2
        # steps and v7x's second TensorCore is fed (no-op on v5e/v6e).
        bm = _round_up((b_rounded + 1) // 2, 8)
    b_padded = _round_up(B, bm)
    nb = b_padded // bm

    state = _cast(state, jnp.float32)
    if b_padded != B:
        state = jnp.pad(state, ((0, b_padded - B), (0, 0)))

    w_bytes = (w1_s.size * w1_s.dtype.itemsize + w2_s.size * w2_s.dtype.itemsize
               + wq_s.size * wq_s.dtype.itemsize + b_s.size * b_s.dtype.itemsize)
    flops = 2 * M * b_padded * (in_dim * h1_pad + h1_pad * h2_pad + h2_pad * n_pad)
    bytes_accessed = (M * b_padded * in_dim * 4            # state, once per model
                      + w_bytes
                      + M * b_padded * n_pad * jnp.dtype(out_dtype).itemsize)

    q_pad = pl.pallas_call(
        _dddqn_kernel,
        out_shape=jax.ShapeDtypeStruct((M, b_padded, n_pad), out_dtype),
        grid_spec=pltpu.PrefetchScalarGridSpec(
            num_scalar_prefetch=0,
            grid=(M, nb),
            in_specs=[
                # state tiles stream along the batch axis
                pl.BlockSpec((bm, in_dim), lambda m, i: (i, 0)),
                # weights/biases: constant block along the batch axis, so they
                # stay VMEM-resident per model (pipeline skips repeat DMAs).
                pl.BlockSpec((1, in_dim, h1_pad), lambda m, i: (m, 0, 0)),
                pl.BlockSpec((1, h1_pad, h2_pad), lambda m, i: (m, 0, 0)),
                pl.BlockSpec((1, h2_pad, n_pad), lambda m, i: (m, 0, 0)),
                pl.BlockSpec((1, 3, w_max), lambda m, i: (m, 0, 0)),
            ],
            out_specs=pl.BlockSpec((1, bm, n_pad), lambda m, i: (m, i, 0)),
        ),
        compiler_params=pltpu.CompilerParams(
            dimension_semantics=("parallel", "parallel")),
        cost_estimate=pl.CostEstimate(
            flops=flops, transcendentals=0, bytes_accessed=bytes_accessed),
    )(state, w1_s, w2_s, wq_s, b_s)

    return q_pad[:, :B, :n_actions]


def dddqn_forward(state, params, model="online", *,
                  dot_dtype=jnp.bfloat16, batch_tile=512, out_dtype=jnp.float32):
    """Single-model forward (same semantics as Policy_DDDQN.forward)."""
    return dddqn_forward_multi(state, params, (model,), dot_dtype=dot_dtype,
                               batch_tile=batch_tile, out_dtype=out_dtype)[0]


def init_params(key, input_dim, n_actions, s1=2.0, s2=1.0):
    """Kaiming-uniform weight init, zero biases (per _create_weights).
    Target networks are deep copies of the online networks (same values)."""
    h1 = int(input_dim * s1)
    h2 = int(input_dim * s2)

    def kaiming_uniform(k, fan_in, fan_out):
        bound = jnp.sqrt(6.0 / fan_in)           # relu gain
        # stored (in, out) -- transposed relative to PyTorch's (out, in)
        return jax.random.uniform(k, (fan_in, fan_out), jnp.float32, -bound, bound)

    keys = jax.random.split(key, 4)
    online = {
        "w1": kaiming_uniform(keys[0], input_dim, h1),
        "b1": jnp.zeros((1, h1), jnp.float32),
        "w2": kaiming_uniform(keys[1], h1, h2),
        "b2": jnp.zeros((1, h2), jnp.float32),
        "wv": kaiming_uniform(keys[2], h2, 1),
        "bv": jnp.zeros((1, 1), jnp.float32),
        "wa": kaiming_uniform(keys[3], h2, n_actions),
        "ba": jnp.zeros((1, n_actions), jnp.float32),
    }
    params = {}
    for name, val in online.items():
        params[f"online/{name}"] = val
        params[f"target/{name}"] = val  # copy.deepcopy -> identical values
    return params


def dddqn_forward_ref(state, params, model="online", dot_dtype=jnp.float32):
    """Pure-JAX reference mirroring the PyTorch module's forward."""
    w1 = _cast(params[f"{model}/w1"], dot_dtype); b1 = params[f"{model}/b1"]
    w2 = _cast(params[f"{model}/w2"], dot_dtype); b2 = params[f"{model}/b2"]
    wv = _cast(params[f"{model}/wv"], dot_dtype); bv = params[f"{model}/bv"]
    wa = _cast(params[f"{model}/wa"], dot_dtype); ba = params[f"{model}/ba"]
    h1 = jnp.maximum(jnp.dot(_cast(state, dot_dtype), w1,
                             preferred_element_type=jnp.float32) + b1, 0.0)
    h2 = jnp.maximum(jnp.dot(_cast(h1, dot_dtype), w2,
                             preferred_element_type=jnp.float32) + b2, 0.0)
    v = jnp.dot(_cast(h2, dot_dtype), wv, preferred_element_type=jnp.float32) + bv
    adv = jnp.dot(_cast(h2, dot_dtype), wa, preferred_element_type=jnp.float32) + ba
    return v + adv - jnp.mean(adv, axis=1, keepdims=True)


if __name__ == "__main__":
    key = jax.random.PRNGKey(0)
    k_state, k_params = jax.random.split(key)

    # input_dim=32, statescale_l1=2, statescale_l2=1 -> hidden 64/32; 4 actions.
    batch, input_dim, n_actions = 8, 32, 4
    state = jax.random.normal(k_state, (batch, input_dim), jnp.float32)
    params = init_params(k_params, input_dim, n_actions, s1=2.0, s2=1.0)
    q_ref_f32 = dddqn_forward_ref(state, params, "online", dot_dtype=jnp.float32)

    # Default path: bf16 MXU inputs / f32 accumulate; online + target in ONE call.
    q_both = dddqn_forward_multi(state, params, ("online", "target"))
    jax.block_until_ready(q_both)
    assert q_both.shape == (2, batch, n_actions)
    assert jnp.allclose(q_both[0], q_ref_f32, atol=5e-2, rtol=5e-2)
    # target == copy.deepcopy(online) -> identical outputs
    assert jnp.allclose(q_both[0], q_both[1])

    # Full-precision path: matches the PyTorch module's f32 semantics
    # (dueling fold is algebraically exact; tolerance covers f32 reordering).
    q_f32 = dddqn_forward(state, params, model="online", dot_dtype=jnp.float32)
    jax.block_until_ready(q_f32)
    assert q_f32.shape == (batch, n_actions)
    assert jnp.allclose(q_f32, q_ref_f32, atol=1e-4, rtol=1e-4)

    # Larger single-model batch: exercises the >=2-tile split (v7x 2nd core).
    big_state = jax.random.normal(k_state, (300, input_dim), jnp.float32)
    q_big = dddqn_forward(big_state, params, model="online")
    jax.block_until_ready(q_big)
    assert q_big.shape == (300, n_actions)
    q_big_ref = dddqn_forward_ref(big_state, params, "online", dot_dtype=jnp.float32)
    assert jnp.allclose(q_big, q_big_ref, atol=5e-2, rtol=5e-2)

    print("KERNEL_OK")
</pallas_src>

<mosaic_0001>
module attributes {stable_mosaic.version = 11 : i64} {
  func.func @_dddqn_kernel(%arg0: i32, %arg1: i32, %arg2: memref<8x32xf32, #tpu.memory_space<vmem>>, %arg3: memref<1x32x128xbf16, #tpu.memory_space<vmem>>, %arg4: memref<1x128x128xbf16, #tpu.memory_space<vmem>>, %arg5: memref<1x128x128xbf16, #tpu.memory_space<vmem>>, %arg6: memref<1x3x128xf32, #tpu.memory_space<vmem>>, %arg7: memref<1x8x128xf32, #tpu.memory_space<vmem>>) attributes {dimension_semantics = [#tpu.dimension_semantics<parallel>, #tpu.dimension_semantics<parallel>], iteration_bounds = array<i64: 2, 1>, scalar_prefetch = 0 : i64, scratch_operands = 0 : i64, tpu.core_type = #tpu.core_type<tc>, window_params = [{transform_indices = @transform_0, window_bounds = array<i64: 8, 32>}, {transform_indices = @transform_1, window_bounds = array<i64: 1, 32, 128>}, {transform_indices = @transform_2, window_bounds = array<i64: 1, 128, 128>}, {transform_indices = @transform_3, window_bounds = array<i64: 1, 128, 128>}, {transform_indices = @transform_4, window_bounds = array<i64: 1, 3, 128>}, {transform_indices = @transform_5, window_bounds = array<i64: 1, 8, 128>}]} {
    %c0 = arith.constant 0 : index
    %c0_0 = arith.constant 0 : index
    %0 = vector.load %arg2[%c0, %c0_0] : memref<8x32xf32, #tpu.memory_space<vmem>>, vector<8x32xf32>
    %c0_1 = arith.constant 0 : index
    %c0_2 = arith.constant 0 : index
    %c0_3 = arith.constant 0 : index
    %1 = vector.load %arg3[%c0_1, %c0_2, %c0_3] : memref<1x32x128xbf16, #tpu.memory_space<vmem>>, vector<1x32x128xbf16>
    %2 = vector.shape_cast %1 : vector<1x32x128xbf16> to vector<32x128xbf16>
    %c0_4 = arith.constant 0 : index
    %c0_5 = arith.constant 0 : index
    %c0_6 = arith.constant 0 : index
    %3 = vector.load %arg4[%c0_4, %c0_5, %c0_6] : memref<1x128x128xbf16, #tpu.memory_space<vmem>>, vector<1x128x128xbf16>
    %4 = vector.shape_cast %3 : vector<1x128x128xbf16> to vector<128x128xbf16>
    %c0_7 = arith.constant 0 : index
    %c0_8 = arith.constant 0 : index
    %c0_9 = arith.constant 0 : index
    %5 = vector.load %arg5[%c0_7, %c0_8, %c0_9] : memref<1x128x128xbf16, #tpu.memory_space<vmem>>, vector<1x128x128xbf16>
    %6 = vector.shape_cast %5 : vector<1x128x128xbf16> to vector<128x128xbf16>
    %c0_10 = arith.constant 0 : index
    %c0_11 = arith.constant 0 : index
    %c0_12 = arith.constant 0 : index
    %7 = vector.load %arg6[%c0_10, %c0_11, %c0_12] : memref<1x3x128xf32, #tpu.memory_space<vmem>>, vector<1x3x128xf32>
    %8 = vector.shape_cast %7 : vector<1x3x128xf32> to vector<3x128xf32>
    %9 = vector.extract_strided_slice %8 {offsets = [0, 0], sizes = [1, 128], strides = [1, 1]} : vector<3x128xf32> to vector<1x128xf32>
    %10 = vector.extract_strided_slice %8 {offsets = [1, 0], sizes = [1, 128], strides = [1, 1]} : vector<3x128xf32> to vector<1x128xf32>
    %11 = vector.extract_strided_slice %8 {offsets = [2, 0], sizes = [1, 128], strides = [1, 1]} : vector<3x128xf32> to vector<1x128xf32>
    %12 = arith.truncf %0 : vector<8x32xf32> to vector<8x32xbf16>
    %cst = arith.constant dense<0.000000e+00> : vector<8x128xf32>
    %13 = tpu.matmul %12, %2, %cst {dimension_numbers = #tpu.dot_dimension_numbers<[1], [0], [0], [1], [0, 0, 1, 1], [], []>} : vector<8x32xbf16>, vector<32x128xbf16>, vector<8x128xf32> -> vector<8x128xf32>
    %14 = vector.broadcast %9 : vector<1x128xf32> to vector<8x128xf32>
    %15 = arith.addf %13, %14 : vector<8x128xf32>
    %cst_13 = arith.constant 0.000000e+00 : f32
    %16 = vector.broadcast %cst_13 : f32 to vector<8x128xf32>
    %17 = arith.maximumf %15, %16 : vector<8x128xf32>
    %18 = arith.truncf %17 : vector<8x128xf32> to vector<8x128xbf16>
    %cst_14 = arith.constant dense<0.000000e+00> : vector<8x128xf32>
    %19 = tpu.matmul %18, %4, %cst_14 {dimension_numbers = #tpu.dot_dimension_numbers<[1], [0], [0], [1], [0, 0, 1, 1], [], []>} : vector<8x128xbf16>, vector<128x128xbf16>, vector<8x128xf32> -> vector<8x128xf32>
    %20 = vector.broadcast %10 : vector<1x128xf32> to vector<8x128xf32>
    %21 = arith.addf %19, %20 : vector<8x128xf32>
    %cst_15 = arith.constant 0.000000e+00 : f32
    %22 = vector.broadcast %cst_15 : f32 to vector<8x128xf32>
    %23 = arith.maximumf %21, %22 : vector<8x128xf32>
    %24 = arith.truncf %23 : vector<8x128xf32> to vector<8x128xbf16>
    %cst_16 = arith.constant dense<0.000000e+00> : vector<8x128xf32>
    %25 = tpu.matmul %24, %6, %cst_16 {dimension_numbers = #tpu.dot_dimension_numbers<[1], [0], [0], [1], [0, 0, 1, 1], [], []>} : vector<8x128xbf16>, vector<128x128xbf16>, vector<8x128xf32> -> vector<8x128xf32>
    %26 = vector.broadcast %11 : vector<1x128xf32> to vector<8x128xf32>
    %27 = arith.addf %25, %26 : vector<8x128xf32>
    %c0_17 = arith.constant 0 : index
    %c0_18 = arith.constant 0 : index
    %c0_19 = arith.constant 0 : index
    %28 = vector.load %arg7[%c0_17, %c0_18, %c0_19] : memref<1x8x128xf32, #tpu.memory_space<vmem>>, vector<1x8x128xf32>
    %29 = vector.shape_cast %28 : vector<1x8x128xf32> to vector<8x128xf32>
    %30 = vector.shape_cast %27 : vector<8x128xf32> to vector<1x8x128xf32>
    tpu.vector_store %arg7[%c0_17, %c0_18, %c0_19], %30 {strides = array<i32>} : memref<1x8x128xf32, #tpu.memory_space<vmem>>, vector<1x8x128xf32>,
    return
  }
  func.func @transform_0(%arg0: i32, %arg1: i32) -> (i32, i32) {
    %c0_i32 = arith.constant 0 : i32
    %c0_i32_0 = arith.constant 0 : i32
    return %arg1, %c0_i32 : i32, i32
  }
  func.func @transform_1(%arg0: i32, %arg1: i32) -> (i32, i32, i32) {
    %c0_i32 = arith.constant 0 : i32
    %c0_i32_0 = arith.constant 0 : i32
    %c0_i32_1 = arith.constant 0 : i32
    return %arg0, %c0_i32, %c0_i32_0 : i32, i32, i32
  }
  func.func @transform_2(%arg0: i32, %arg1: i32) -> (i32, i32, i32) {
    %c0_i32 = arith.constant 0 : i32
    %c0_i32_0 = arith.constant 0 : i32
    %c0_i32_1 = arith.constant 0 : i32
    return %arg0, %c0_i32, %c0_i32_0 : i32, i32, i32
  }
  func.func @transform_3(%arg0: i32, %arg1: i32) -> (i32, i32, i32) {
    %c0_i32 = arith.constant 0 : i32
    %c0_i32_0 = arith.constant 0 : i32
    %c0_i32_1 = arith.constant 0 : i32
    return %arg0, %c0_i32, %c0_i32_0 : i32, i32, i32
  }
  func.func @transform_4(%arg0: i32, %arg1: i32) -> (i32, i32, i32) {
    %c0_i32 = arith.constant 0 : i32
    %c0_i32_0 = arith.constant 0 : i32
    %c0_i32_1 = arith.constant 0 : i32
    return %arg0, %c0_i32, %c0_i32_0 : i32, i32, i32
  }
  func.func @transform_5(%arg0: i32, %arg1: i32) -> (i32, i32, i32) {
    %c0_i32 = arith.constant 0 : i32
    %c0_i32_0 = arith.constant 0 : i32
    return %arg0, %arg1, %c0_i32 : i32, i32, i32
  }
}

</mosaic_0001>

<llo_original>
// kernel: tpu_custom_call.1
$region0: #{tpu_custom_call.1}
  #allocation0 [shape = 'u32[]', space=smem, size = 0x4, offset = 0x4, fixed_abs, tag = 'smem constant byte address 0x4 - core index']
  #allocation1 [shape = 'u32[144,128]{1,0:T(1,128)}', space=vmem, size = 0x12000, scoped, tag = 'internal scratch']
  %s0 = inlined_call_operand.vmem [shape: f32[8,32], index: 0, kind: input, shape index: {}]
  %s1 = inlined_call_operand.hbm [shape: bf16[2,32,128], index: 1, kind: input, shape index: {}]
  %s2 = inlined_call_operand.hbm [shape: bf16[2,128,128], index: 2, kind: input, shape index: {}]
  %s3 = inlined_call_operand.hbm [shape: bf16[2,128,128], index: 3, kind: input, shape index: {}]
  %s4 = inlined_call_operand.vmem [shape: f32[2,3,128], index: 4, kind: input, shape index: {}]
  %s5 = inlined_call_operand.hbm [shape: f32[2,8,128], index: 5, kind: output, shape index: {}]
  %s6 = sld [smem:[#allocation0]]
  $region65: #{tpu_custom_call.1} parent=0
    _
  %s8 = ssub.s32 1, %s6
  %s9 = scalar_select 0, %s8, %s6
  $region1: #{tpu_custom_call.1} parent=0
    #allocation2 [shape = 'u8[16384]{0}', space=vmem, size = 0x4000, scoped, tag = 'input window, operand 1']
    #allocation3 [shape = 's32[2]{0}', space=sflag, size = 0x8, scoped, tag = 'scoped memory for tpu_custom_call.1']
    #allocation4 [shape = 's32[2]{0}', space=sflag, size = 0x8, scoped, tag = 'scoped memory for tpu_custom_call.1']
    #allocation5 [shape = 'u8[65536]{0}', space=vmem, size = 0x10000, scoped, tag = 'input window, operand 2']
    #allocation6 [shape = 's32[2]{0}', space=sflag, size = 0x8, scoped, tag = 'scoped memory for tpu_custom_call.1']
    #allocation7 [shape = 'u8[65536]{0}', space=vmem, size = 0x10000, scoped, tag = 'input window, operand 3']
    #allocation8 [shape = 'u8[8192]{0}', space=vmem, size = 0x2000, scoped, tag = 'output window, operand 0']
    %10 = vsyncpa [#allocation3], 0
    %s11 = scalar_lea.sflag [#allocation3], 1
    %12 = vsyncpa %s11, 0
    %13 = vsyncpa [#allocation6], 0
    %s14 = scalar_lea.sflag [#allocation6], 1
    %15 = vsyncpa %s14, 0
    %16 = vsyncpa [#allocation4], 0
    %s17 = scalar_lea.sflag [#allocation4], 1
    %18 = vsyncpa %s17, 0
    loop: start=0, step=1, limit=4
    $region2: #{tpu_custom_call.1} parent=1 // loop_pre_header
      _
    $region3: #{tpu_custom_call.1} parent=1 // loop_header
      %s20 = sphi 0, %s24
      %p21 = scmp.ge.s32.totalorder %s20, 4
      %s27 = sphi 0, %s39
      %s28 = sphi 0, %s35
      %s29 = sphi 0, %s27
      %s30 = sphi 0, %s28
      %s31 = sphi 0, %s29
      %s32 = sphi 0, %s30
      %s42 = sphi 0, %s44
      %s45 = sphi 0, %s42
      %s46 = sphi 0, %s45
      %s62 = sphi 0, %s46
      %s68 = sphi 0, %s70
      %s71 = sphi 0, %s68
      %s72 = sphi 0, %s71
      %s88 = sphi 0, %s72
      %s94 = sphi 0, %s96
      %s97 = sphi 0, %s94
      %s98 = sphi 0, %s97
      %s114 = sphi 0, %s98
      %s120 = sphi 0, %s122
      %s123 = sphi 0, %s120
      %s124 = sphi 0, %s123
      %s140 = sphi 0, %s124
      %s146 = sphi 0, %s148
      %s149 = sphi 0, %s146
      %s150 = sphi 0, %s149
      %s166 = sphi 0, %s150
      %s174 = sphi 0, %s176
      %s177 = sphi 0, %s174
      %s178 = sphi 0, %s177
      %s194 = sphi 0, %s178
    $region4: #{tpu_custom_call.1} parent=1 // loop_header_branch
      %23 = sbr.rel (%p21) target = $region8
    $region5: #{tpu_custom_call.1} parent=1 // loop_body
      %s25 = ssub.s32 %s20, 1
      %s26 = ssub.s32 %s20, 2
      %s33 = sadd.s32 1, %s28
      %p34 = scmp.ge.s32.totalorder %s33, 1
      %s35 = scalar_select %p34, 0, %s33
      %s36 = sadd.s32 1, %s27
      %s37 = scalar_select %p34, %s36, %s27
      %p38 = scmp.ge.s32.totalorder %s37, 2
      %s39 = scalar_select %p38, 0, %s37
      %s40 = ssub.s32 %s28, %s35
      %p41 = scmp.eq.s32.totalorder %s40, 0
      %s43 = sadd.s32 %s42, 1
      %s44 = scalar_select %p41, %s42, %s43
      %p47 = pneg %p41
      %p48 = scmp.eq.s32.totalorder %s20, 1
      %p49 = por %p47, %p48
      %p50 = scmp.ne.s32.totalorder %s42, %s45
      %p51 = scmp.eq.s32.totalorder %s20, 0
      %p52 = por %p50, %p51
      %p53 = scmp.ne.s32.totalorder %s42, %s45
      %p54 = scmp.eq.s32.totalorder %s25, 1
      %p55 = por %p53, %p54
      %p56 = scmp.ne.s32.totalorder %s45, %s46
      %p57 = scmp.eq.s32.totalorder %s25, 0
      %p58 = por %p56, %p57
      %p59 = scmp.ne.s32.totalorder %s45, %s46
      %p60 = scmp.eq.s32.totalorder %s26, 1
      %p61 = por %p59, %p60
      %p63 = scmp.ne.s32.totalorder %s46, %s62
      %p64 = scmp.eq.s32.totalorder %s26, 0
      %p65 = por %p63, %p64
      %s66 = ssub.s32 %s27, %s39
      %p67 = scmp.eq.s32.totalorder %s66, 0
      %s69 = sadd.s32 %s68, 1
      %s70 = scalar_select %p67, %s68, %s69
      %p73 = pneg %p67
      %p74 = scmp.eq.s32.totalorder %s20, 1
      %p75 = por %p73, %p74
      %p76 = scmp.ne.s32.totalorder %s68, %s71
      %p77 = scmp.eq.s32.totalorder %s20, 0
      %p78 = por %p76, %p77
      %p79 = scmp.ne.s32.totalorder %s68, %s71
      %p80 = scmp.eq.s32.totalorder %s25, 1
      %p81 = por %p79, %p80
      %p82 = scmp.ne.s32.totalorder %s71, %s72
      %p83 = scmp.eq.s32.totalorder %s25, 0
      %p84 = por %p82, %p83
      %p85 = scmp.ne.s32.totalorder %s71, %s72
      %p86 = scmp.eq.s32.totalorder %s26, 1
      %p87 = por %p85, %p86
      %p89 = scmp.ne.s32.totalorder %s72, %s88
      %p90 = scmp.eq.s32.totalorder %s26, 0
      %p91 = por %p89, %p90
      %s92 = ssub.s32 %s27, %s39
      %p93 = scmp.eq.s32.totalorder %s92, 0
      %s95 = sadd.s32 %s94, 1
      %s96 = scalar_select %p93, %s94, %s95
      %p99 = pneg %p93
      %p100 = scmp.eq.s32.totalorder %s20, 1
      %p101 = por %p99, %p100
      %p102 = scmp.ne.s32.totalorder %s94, %s97
      %p103 = scmp.eq.s32.totalorder %s20, 0
      %p104 = por %p102, %p103
      %p105 = scmp.ne.s32.totalorder %s94, %s97
      %p106 = scmp.eq.s32.totalorder %s25, 1
      %p107 = por %p105, %p106
      %p108 = scmp.ne.s32.totalorder %s97, %s98
      %p109 = scmp.eq.s32.totalorder %s25, 0
      %p110 = por %p108, %p109
      %p111 = scmp.ne.s32.totalorder %s97, %s98
      %p112 = scmp.eq.s32.totalorder %s26, 1
      %p113 = por %p111, %p112
      %p115 = scmp.ne.s32.totalorder %s98, %s114
      %p116 = scmp.eq.s32.totalorder %s26, 0
      %p117 = por %p115, %p116
      %s118 = ssub.s32 %s27, %s39
      %p119 = scmp.eq.s32.totalorder %s118, 0
      %s121 = sadd.s32 %s120, 1
      %s122 = scalar_select %p119, %s120, %s121
      %p125 = pneg %p119
      %p126 = scmp.eq.s32.totalorder %s20, 1
      %p127 = por %p125, %p126
      %p128 = scmp.ne.s32.totalorder %s120, %s123
      %p129 = scmp.eq.s32.totalorder %s20, 0
      %p130 = por %p128, %p129
      %p131 = scmp.ne.s32.totalorder %s120, %s123
      %p132 = scmp.eq.s32.totalorder %s25, 1
      %p133 = por %p131, %p132
      %p134 = scmp.ne.s32.totalorder %s123, %s124
      %p135 = scmp.eq.s32.totalorder %s25, 0
      %p136 = por %p134, %p135
      %p137 = scmp.ne.s32.totalorder %s123, %s124
      %p138 = scmp.eq.s32.totalorder %s26, 1
      %p139 = por %p137, %p138
      %p141 = scmp.ne.s32.totalorder %s124, %s140
      %p142 = scmp.eq.s32.totalorder %s26, 0
      %p143 = por %p141, %p142
      %s144 = ssub.s32 %s27, %s39
      %p145 = scmp.eq.s32.totalorder %s144, 0
      %s147 = sadd.s32 %s146, 1
      %s148 = scalar_select %p145, %s146, %s147
      %p151 = pneg %p145
      %p152 = scmp.eq.s32.totalorder %s20, 1
      %p153 = por %p151, %p152
      %p154 = scmp.ne.s32.totalorder %s146, %s149
      %p155 = scmp.eq.s32.totalorder %s20, 0
      %p156 = por %p154, %p155
      %p157 = scmp.ne.s32.totalorder %s146, %s149
      %p158 = scmp.eq.s32.totalorder %s25, 1
      %p159 = por %p157, %p158
      %p160 = scmp.ne.s32.totalorder %s149, %s150
      %p161 = scmp.eq.s32.totalorder %s25, 0
      %p162 = por %p160, %p161
      %p163 = scmp.ne.s32.totalorder %s149, %s150
      %p164 = scmp.eq.s32.totalorder %s26, 1
      %p165 = por %p163, %p164
      %p167 = scmp.ne.s32.totalorder %s150, %s166
      %p168 = scmp.eq.s32.totalorder %s26, 0
      %p169 = por %p167, %p168
      %s170 = ssub.s32 %s27, %s39
      %s171 = ssub.s32 %s28, %s35
      %s172 = sor.u32 %s170, %s171
      %p173 = scmp.eq.s32.totalorder %s172, 0
      %s175 = sadd.s32 %s174, 1
      %s176 = scalar_select %p173, %s174, %s175
      %p179 = pneg %p173
      %p180 = scmp.eq.s32.totalorder %s20, 1
      %p181 = por %p179, %p180
      %p182 = scmp.ne.s32.totalorder %s174, %s177
      %p183 = scmp.eq.s32.totalorder %s20, 0
      %p184 = por %p182, %p183
      %p185 = scmp.ne.s32.totalorder %s174, %s177
      %p186 = scmp.eq.s32.totalorder %s25, 1
      %p187 = por %p185, %p186
      %p188 = scmp.ne.s32.totalorder %s177, %s178
      %p189 = scmp.eq.s32.totalorder %s25, 0
      %p190 = por %p188, %p189
      %p191 = scmp.ne.s32.totalorder %s177, %s178
      %p192 = scmp.eq.s32.totalorder %s26, 1
      %p193 = por %p191, %p192
      %p195 = scmp.ne.s32.totalorder %s178, %s194
      %p196 = scmp.eq.s32.totalorder %s26, 0
      %p197 = por %p195, %p196
      %p198 = scmp.le.s32.totalorder 1, %s20
      %p199 = scmp.lt.s32.totalorder %s20, 3
      %p200 = pnand %p198, %p199
      %p201 = pneg %p200
      // Predicated region
      $region9: #{tpu_custom_call.1} parent=5 // pred_check
        _
      $region10: #{tpu_custom_call.1} parent=5 // pred_check_branch
        %203 = sbr.rel (%p200) target = $region12
      $region11: #{tpu_custom_call.1} parent=5 // pred_region
        %s204 = ssub.s32 %s20, 1
        // Predicated region
        $region13: #{tpu_custom_call.1} parent=11 // pred_check
          %p205 = pneg %p58
        $region14: #{tpu_custom_call.1} parent=11 // pred_check_branch
          %207 = sbr.rel (%p205) target = $region16
        $region15: #{tpu_custom_call.1} parent=11 // pred_region
          %p208 = scmp.lt.s32.totalorder %s30, 0
          %s209 = scalar_select %p208, %s30, 0
          %s210 = smul.addr %s209, 8
          %s211 = scalar_lea.vmem %s0, %s210
        $region16: #{tpu_custom_call.1} parent=11 // pred_fallthru
          _
      $region12: #{tpu_custom_call.1} parent=5 // pred_fallthru
        _
      %p212 = scmp.lt.s32.totalorder %s20, 2
      // Predicated region
      $region17: #{tpu_custom_call.1} parent=5 // pred_check
        %p213 = pneg %p212
      $region18: #{tpu_custom_call.1} parent=5 // pred_check_branch
        %215 = sbr.rel (%p213) target = $region20
      $region19: #{tpu_custom_call.1} parent=5 // pred_region
        // Predicated region
        $region21: #{tpu_custom_call.1} parent=19 // pred_check
          %p216 = pneg %p78
        $region22: #{tpu_custom_call.1} parent=19 // pred_check_branch
          %218 = sbr.rel (%p216) target = $region24
        $region23: #{tpu_custom_call.1} parent=19 // pred_region
          %s219 = sand.u32 %s68, 1
          %s220 = scalar_lea.sflag [#allocation3], %s219
          %s221 = sand.u32 %s68, 1
          %s222 = smul.addr %s221, 16
          %s223 = scalar_lea.vmem [#allocation2], %s222
          %s225 = ssub.s32 256, 256
          %226 = vsyncadd %s220, %s225
          %s227 = smul.addr %s27, 4
          %s228 = smul.addr %s227, 64
          %s229 = scalar_lea.hbm %s1, %s228
          %s230 = sshll.u32 %s223, 4
          %s231 = int_to_ptr.vmem [resolvable:$true] %s230
          %236 = dma.hbm_to_vmem [thread:$0]  %s229, 256, %s231, %s220, 64, 64, 4
        $region24: #{tpu_custom_call.1} parent=19 // pred_fallthru
          _
        // Predicated region
        $region25: #{tpu_custom_call.1} parent=19 // pred_check
          %p237 = pneg %p104
        $region26: #{tpu_custom_call.1} parent=19 // pred_check_branch
          %239 = sbr.rel (%p237) target = $region28
        $region27: #{tpu_custom_call.1} parent=19 // pred_region
          %s240 = sand.u32 %s20, 1
          %s241 = scalar_lea.sflag [#allocation6], %s240
          %s242 = sand.u32 %s94, 1
          %s243 = smul.addr %s242, 64
          %s244 = scalar_lea.vmem [#allocation5], %s243
          %s246 = ssub.s32 1024, 1024
          %247 = vsyncadd %s241, %s246
          %s248 = smul.addr %s27, 16
          %s249 = smul.addr %s248, 64
          %s250 = scalar_lea.hbm %s2, %s249
          %s251 = sshll.u32 %s244, 4
          %s252 = int_to_ptr.vmem [resolvable:$true] %s251
          %257 = dma.hbm_to_vmem [thread:$0]  %s250, 1024, %s252, %s241, 64, 64, 4
        $region28: #{tpu_custom_call.1} parent=19 // pred_fallthru
          _
        // Predicated region
        $region29: #{tpu_custom_call.1} parent=19 // pred_check
          %p258 = pneg %p130
        $region30: #{tpu_custom_call.1} parent=19 // pred_check_branch
          %260 = sbr.rel (%p258) target = $region32
        $region31: #{tpu_custom_call.1} parent=19 // pred_region
          %s261 = sand.u32 %s20, 1
          %s262 = scalar_lea.sflag [#allocation6], %s261
          %s263 = sand.u32 %s120, 1
          %s264 = smul.addr %s263, 64
          %s265 = scalar_lea.vmem [#allocation7], %s264
          %s267 = ssub.s32 1024, 1024
          %268 = vsyncadd %s262, %s267
          %s269 = smul.addr %s27, 16
          %s270 = smul.addr %s269, 64
          %s271 = scalar_lea.hbm %s3, %s270
          %s272 = sshll.u32 %s265, 4
          %s273 = int_to_ptr.vmem [resolvable:$true] %s272
          %278 = dma.hbm_to_vmem [thread:$0]  %s271, 1024, %s273, %s262, 64, 64, 4
        $region32: #{tpu_custom_call.1} parent=19 // pred_fallthru
          _
        // Predicated region
        $region33: #{tpu_custom_call.1} parent=19 // pred_check
          %p279 = pneg %p156
        $region34: #{tpu_custom_call.1} parent=19 // pred_check_branch
          %281 = sbr.rel (%p279) target = $region36
        $region35: #{tpu_custom_call.1} parent=19 // pred_region
          %p282 = scmp.lt.s32.totalorder %s27, 1
          %s283 = scalar_select %p282, %s27, 1
          %s284 = smul.addr %s283, 4
          %s285 = scalar_lea.vmem %s4, %s284
        $region36: #{tpu_custom_call.1} parent=19 // pred_fallthru
          _
      $region20: #{tpu_custom_call.1} parent=5 // pred_fallthru
        _
      %p286 = scmp.le.s32.totalorder 1, %s20
      %p287 = scmp.lt.s32.totalorder %s20, 3
      %p288 = pnand %p286, %p287
      %p289 = pneg %p288
      // Predicated region
      $region37: #{tpu_custom_call.1} parent=5 // pred_check
        _
      $region38: #{tpu_custom_call.1} parent=5 // pred_check_branch
        %291 = sbr.rel (%p288) target = $region40
      $region39: #{tpu_custom_call.1} parent=5 // pred_region
        %s292 = ssub.s32 %s20, 1
        %s293 = sand.u32 %s71, 1
        %s294 = scalar_lea.sflag [#allocation3], %s293
        %s295 = sand.u32 %s71, 1
        %s296 = smul.addr %s295, 16
        %s297 = scalar_lea.vmem [#allocation2], %s296
        // Predicated region
        $region41: #{tpu_custom_call.1} parent=39 // pred_check
          %p298 = pneg %p84
        $region42: #{tpu_custom_call.1} parent=39 // pred_check_branch
          %300 = sbr.rel (%p298) target = $region44
        $region43: #{tpu_custom_call.1} parent=39 // pred_region
          %301 = dma.done %s294, 256
        $region44: #{tpu_custom_call.1} parent=39 // pred_fallthru
          _
        %s302 = sand.u32 %s25, 1
        %s303 = scalar_lea.sflag [#allocation6], %s302
        %s304 = sand.u32 %s97, 1
        %s305 = smul.addr %s304, 64
        %s306 = scalar_lea.vmem [#allocation5], %s305
        // Predicated region
        $region45: #{tpu_custom_call.1} parent=39 // pred_check
          %p307 = pneg %p110
        $region46: #{tpu_custom_call.1} parent=39 // pred_check_branch
          %309 = sbr.rel (%p307) target = $region48
        $region47: #{tpu_custom_call.1} parent=39 // pred_region
          %310 = dma.done %s303, 1024
        $region48: #{tpu_custom_call.1} parent=39 // pred_fallthru
          _
        %s311 = sand.u32 %s25, 1
        %s312 = scalar_lea.sflag [#allocation6], %s311
        %s313 = sand.u32 %s123, 1
        %s314 = smul.addr %s313, 64
        %s315 = scalar_lea.vmem [#allocation7], %s314
        // Predicated region
        $region49: #{tpu_custom_call.1} parent=39 // pred_check
          %p316 = pneg %p136
        $region50: #{tpu_custom_call.1} parent=39 // pred_check_branch
          %318 = sbr.rel (%p316) target = $region52
        $region51: #{tpu_custom_call.1} parent=39 // pred_region
          %319 = dma.done %s312, 1024
        $region52: #{tpu_custom_call.1} parent=39 // pred_fallthru
          _
        %p320 = scmp.lt.s32.totalorder %s30, 0
        %s321 = scalar_select %p320, %s30, 0
        %s322 = smul.addr %s321, 8
        %s323 = scalar_lea.vmem %s0, %s322
        %p324 = pneg %p58
        %p325 = pneg %p55
        %s326 = sand.u32 %s71, 1
        %s327 = scalar_lea.sflag [#allocation3], %s326
        %s328 = sand.u32 %s71, 1
        %s329 = smul.addr %s328, 16
        %s330 = scalar_lea.vmem [#allocation2], %s329
        %p331 = pneg %p84
        %p332 = pneg %p81
        %s333 = sand.u32 %s25, 1
        %s334 = scalar_lea.sflag [#allocation6], %s333
        %s335 = sand.u32 %s97, 1
        %s336 = smul.addr %s335, 64
        %s337 = scalar_lea.vmem [#allocation5], %s336
        %p338 = pneg %p110
        %p339 = pneg %p107
        %s340 = sand.u32 %s25, 1
        %s341 = scalar_lea.sflag [#allocation6], %s340
        %s342 = sand.u32 %s123, 1
        %s343 = smul.addr %s342, 64
        %s344 = scalar_lea.vmem [#allocation7], %s343
        %p345 = pneg %p136
        %p346 = pneg %p133
        %p347 = scmp.lt.s32.totalorder %s29, 1
        %s348 = scalar_select %p347, %s29, 1
        %s349 = smul.addr %s348, 4
        %s350 = scalar_lea.vmem %s4, %s349
        %p351 = pneg %p162
        %p352 = pneg %p159
        %p353 = pneg %p190
        %p354 = pneg %p187
        %s355 = sand.u32 %s177, 1
        %s356 = scalar_lea.sflag [#allocation4], %s355
        %s357 = sand.u32 %s177, 1
        %s358 = smul.addr %s357, 8
        %s359 = scalar_lea.vmem [#allocation8], %s358
        %p360 = scmp.lt.s32.totalorder %s30, 0
        %s361 = scalar_select %p360, %s30, 0
        %s362 = smul.addr %s361, 8
        %s363 = scalar_lea.vmem %s0, %s362
        %p364 = scmp.lt.s32.totalorder %s29, 1
        %s365 = scalar_select %p364, %s29, 1
        %s366 = smul.addr %s365, 4
        %s367 = scalar_lea.vmem %s4, %s366
        %v369 = vld [vmem:[%s363] sm:$0xff]
        %v370 = vld [vmem:[%s297] sm:$0xf]
        %v371 = vld [vmem:[%s297 + $0x4] sm:$0xf]
        %v372 = vld [vmem:[%s297 + $0x8] sm:$0xf]
        %v373 = vld [vmem:[%s297 + $0xc] sm:$0xf]
        %v374 = vld [vmem:[%s306] sm:$0xf]
        %v375 = vld [vmem:[%s306 + $0x4] sm:$0xf]
        %v376 = vld [vmem:[%s306 + $0x8] sm:$0xf]
        %v377 = vld [vmem:[%s306 + $0xc] sm:$0xf]
        %v378 = vld [vmem:[%s306 + $0x10] sm:$0xf]
        %v379 = vld [vmem:[%s306 + $0x14] sm:$0xf]
        %v380 = vld [vmem:[%s306 + $0x18] sm:$0xf]
        %v381 = vld [vmem:[%s306 + $0x1c] sm:$0xf]
        %v382 = vld [vmem:[%s306 + $0x20] sm:$0xf]
        %v383 = vld [vmem:[%s306 + $0x24] sm:$0xf]
        %v384 = vld [vmem:[%s306 + $0x28] sm:$0xf]
        %v385 = vld [vmem:[%s306 + $0x2c] sm:$0xf]
        %v386 = vld [vmem:[%s306 + $0x30] sm:$0xf]
        %v387 = vld [vmem:[%s306 + $0x34] sm:$0xf]
        %v388 = vld [vmem:[%s306 + $0x38] sm:$0xf]
        %v389 = vld [vmem:[%s306 + $0x3c] sm:$0xf]
        %v390 = vld [vmem:[%s315] sm:$0xf]
        %v391 = vld [vmem:[%s315 + $0x4] sm:$0xf]
        %v392 = vld [vmem:[%s315 + $0x8] sm:$0xf]
        %v393 = vld [vmem:[%s315 + $0xc] sm:$0xf]
        %v394 = vld [vmem:[%s315 + $0x10] sm:$0xf]
        %v395 = vld [vmem:[%s315 + $0x14] sm:$0xf]
        %v396 = vld [vmem:[%s315 + $0x18] sm:$0xf]
        %v397 = vld [vmem:[%s315 + $0x1c] sm:$0xf]
        %v398 = vld [vmem:[%s315 + $0x20] sm:$0xf]
        %v399 = vld [vmem:[%s315 + $0x24] sm:$0xf]
        %v400 = vld [vmem:[%s315 + $0x28] sm:$0xf]
        %v401 = vld [vmem:[%s315 + $0x2c] sm:$0xf]
        %v402 = vld [vmem:[%s315 + $0x30] sm:$0xf]
        %v403 = vld [vmem:[%s315 + $0x34] sm:$0xf]
        %v404 = vld [vmem:[%s315 + $0x38] sm:$0xf]
        %v405 = vld [vmem:[%s315 + $0x3c] sm:$0xf]
        %v406 = vld [vmem:[%s367] sm:$0x7]
        %v407 = vpack.c.bf16 %v369, %v369
        %v408 = vlaneseq
        %v409 = vshrl.u32 %v408, 7
        %v410 = vsub.s32 0, %v409
        %v411 = vrot.slane %v406, %v410
        %v416 = vunpack.c.l.b16 %v370
        %v417 = vunpack.c.l.b16 %v371
        %v418 = vunpack.c.l.b16 %v372
        %v419 = vunpack.c.l.b16 %v373
        %v420 = vpack.c.b16 %v417, %v416
        %v421 = vpack.c.b16 %v419, %v418
        %vm424 = vcmask 261120
        %v426 = vsel %vm424, %v407, 0
        %428 = vmatprep.subr.bf16.mxu0 0
        %429 = vmatpush1.bf16.msra.mxu0 %v420
        %430 = vmatprep.subr.bf16.mxu0 0
        %431 = vmatpush1.bf16.msra.mxu0 %v421
        %432 = vmatprep.subr.bf16.mxu0 0
        %433 = vmatpush1.bf16.msra.mxu0 0
        %434 = vmatprep.subr.bf16.mxu0 0
        %435 = vmatpush1.bf16.msra.mxu0 0
        %436 = vmatprep.subr.bf16.mxu0 0
        %437 = vmatpush1.bf16.msra.mxu0 0
        %438 = vmatprep.subr.bf16.mxu0 0
        %439 = vmatpush1.bf16.msra.mxu0 0
        %440 = vmatprep.subr.bf16.mxu0 0
        %441 = vmatpush1.bf16.msra.mxu0 0
        %442 = vmatprep.subr.bf16.mxu0 0
        %443 = vmatpush1.bf16.msra.mxu0 0
        %444 = vmatprep.subr.bf16.mxu0 0
        %445 = vmatpush1.bf16.msra.mxu0 0
        %446 = vmatprep.subr.bf16.mxu0 0
        %447 = vmatpush1.bf16.msra.mxu0 0
        %448 = vmatprep.subr.bf16.mxu0 0
        %449 = vmatpush1.bf16.msra.mxu0 0
        %450 = vmatprep.subr.bf16.mxu0 0
        %451 = vmatpush1.bf16.msra.mxu0 0
        %452 = vmatprep.subr.bf16.mxu0 0
        %453 = vmatpush1.bf16.msra.mxu0 0
        %454 = vmatprep.subr.bf16.mxu0 0
        %455 = vmatpush1.bf16.msra.mxu0 0
        %456 = vmatprep.subr.bf16.mxu0 0
        %457 = vmatpush1.bf16.msra.mxu0 0
        %458 = vmatprep.subr.bf16.mxu0 0
        %459 = vmatpush1.bf16.msra.mxu0 0
        %460 = vmatprep.mubr.bf16.mxu0 0
        %461 = vmatmul.mubr.bf16.gmra.mrb[0].mxu0 %v426
        %v462 = vpop.f32.mrb[0].mxu0
        %v463 = vadd.f32 %v411, %v462
        %v464 = vpop.f32.mrb[0].mxu0
        %v465 = vpop.f32.mrb[0].mxu0
        %v466 = vpop.f32.mrb[0].mxu0
        %467 = vdwg.mxu0
        %v468 = vmax.f32 %v463, 0.0
        %v469 = vpack.c.bf16 %v468, %v468
        %v470 = vlaneseq
        %v471 = vshrl.u32 %v470, 7
        %v472 = vsub.s32 1, %v471
        %v473 = vrot.slane %v406, %v472
        %v490 = vunpack.c.l.b16 %v374
        %v491 = vunpack.c.l.b16 %v375
        %v492 = vunpack.c.l.b16 %v376
        %v493 = vunpack.c.l.b16 %v377
        %v494 = vunpack.c.l.b16 %v378
        %v495 = vunpack.c.l.b16 %v379
        %v496 = vunpack.c.l.b16 %v380
        %v497 = vunpack.c.l.b16 %v381
        %v498 = vunpack.c.l.b16 %v382
        %v499 = vunpack.c.l.b16 %v383
        %v500 = vunpack.c.l.b16 %v384
        %v501 = vunpack.c.l.b16 %v385
        %v502 = vunpack.c.l.b16 %v386
        %v503 = vunpack.c.l.b16 %v387
        %v504 = vunpack.c.l.b16 %v388
        %v505 = vunpack.c.l.b16 %v389
        %v506 = vpack.c.b16 %v491, %v490
        %v507 = vpack.c.b16 %v493, %v492
        %v508 = vpack.c.b16 %v495, %v494
        %v509 = vpack.c.b16 %v497, %v496
        %v510 = vpack.c.b16 %v499, %v498
        %v511 = vpack.c.b16 %v501, %v500
        %v512 = vpack.c.b16 %v503, %v502
        %v513 = vpack.c.b16 %v505, %v504
        %522 = vmatprep.subr.bf16.mxu0 0
        %523 = vmatpush1.bf16.msra.mxu0 %v506
        %524 = vmatprep.subr.bf16.mxu0 0
        %525 = vmatpush1.bf16.msra.mxu0 %v507
        %526 = vmatprep.subr.bf16.mxu0 0
        %527 = vmatpush1.bf16.msra.mxu0 %v508
        %528 = vmatprep.subr.bf16.mxu0 0
        %529 = vmatpush1.bf16.msra.mxu0 %v509
        %530 = vmatprep.subr.bf16.mxu0 0
        %531 = vmatpush1.bf16.msra.mxu0 %v510
        %532 = vmatprep.subr.bf16.mxu0 0
        %533 = vmatpush1.bf16.msra.mxu0 %v511
        %534 = vmatprep.subr.bf16.mxu0 0
        %535 = vmatpush1.bf16.msra.mxu0 %v512
        %536 = vmatprep.subr.bf16.mxu0 0
        %537 = vmatpush1.bf16.msra.mxu0 %v513
        %538 = vmatprep.subr.bf16.mxu0 0
        %539 = vmatpush1.bf16.msra.mxu0 0
        %540 = vmatprep.subr.bf16.mxu0 0
        %541 = vmatpush1.bf16.msra.mxu0 0
        %542 = vmatprep.subr.bf16.mxu0 0
        %543 = vmatpush1.bf16.msra.mxu0 0
        %544 = vmatprep.subr.bf16.mxu0 0
        %545 = vmatpush1.bf16.msra.mxu0 0
        %546 = vmatprep.subr.bf16.mxu0 0
        %547 = vmatpush1.bf16.msra.mxu0 0
        %548 = vmatprep.subr.bf16.mxu0 0
        %549 = vmatpush1.bf16.msra.mxu0 0
        %550 = vmatprep.subr.bf16.mxu0 0
        %551 = vmatpush1.bf16.msra.mxu0 0
        %552 = vmatprep.subr.bf16.mxu0 0
        %553 = vmatpush1.bf16.msra.mxu0 0
        %554 = vmatprep.mubr.bf16.mxu0 0
        %555 = vmatmul.mubr.bf16.gmra.mrb[0].mxu0 %v469
        %v556 = vpop.f32.mrb[0].mxu0
        %v557 = vadd.f32 %v473, %v556
        %v558 = vpop.f32.mrb[0].mxu0
        %v559 = vpop.f32.mrb[0].mxu0
        %v560 = vpop.f32.mrb[0].mxu0
        %561 = vdwg.mxu0
        %v562 = vmax.f32 %v557, 0.0
        %v563 = vpack.c.bf16 %v562, %v562
        %v564 = vlaneseq
        %v565 = vshrl.u32 %v564, 7
        %v566 = vsub.s32 2, %v565
        %v567 = vrot.slane %v406, %v566
        %v584 = vunpack.c.l.b16 %v390
        %v585 = vunpack.c.l.b16 %v391
        %v586 = vunpack.c.l.b16 %v392
        %v587 = vunpack.c.l.b16 %v393
        %v588 = vunpack.c.l.b16 %v394
        %v589 = vunpack.c.l.b16 %v395
        %v590 = vunpack.c.l.b16 %v396
        %v591 = vunpack.c.l.b16 %v397
        %v592 = vunpack.c.l.b16 %v398
        %v593 = vunpack.c.l.b16 %v399
        %v594 = vunpack.c.l.b16 %v400
        %v595 = vunpack.c.l.b16 %v401
        %v596 = vunpack.c.l.b16 %v402
        %v597 = vunpack.c.l.b16 %v403
        %v598 = vunpack.c.l.b16 %v404
        %v599 = vunpack.c.l.b16 %v405
        %v600 = vpack.c.b16 %v585, %v584
        %v601 = vpack.c.b16 %v587, %v586
        %v602 = vpack.c.b16 %v589, %v588
        %v603 = vpack.c.b16 %v591, %v590
        %v604 = vpack.c.b16 %v593, %v592
        %v605 = vpack.c.b16 %v595, %v594
        %v606 = vpack.c.b16 %v597, %v596
        %v607 = vpack.c.b16 %v599, %v598
        %616 = vmatprep.subr.bf16.mxu0 0
        %617 = vmatpush1.bf16.msra.mxu0 %v600
        %618 = vmatprep.subr.bf16.mxu0 0
        %619 = vmatpush1.bf16.msra.mxu0 %v601
        %620 = vmatprep.subr.bf16.mxu0 0
        %621 = vmatpush1.bf16.msra.mxu0 %v602
        %622 = vmatprep.subr.bf16.mxu0 0
        %623 = vmatpush1.bf16.msra.mxu0 %v603
        %624 = vmatprep.subr.bf16.mxu0 0
        %625 = vmatpush1.bf16.msra.mxu0 %v604
        %626 = vmatprep.subr.bf16.mxu0 0
        %627 = vmatpush1.bf16.msra.mxu0 %v605
        %628 = vmatprep.subr.bf16.mxu0 0
        %629 = vmatpush1.bf16.msra.mxu0 %v606
        %630 = vmatprep.subr.bf16.mxu0 0
        %631 = vmatpush1.bf16.msra.mxu0 %v607
        %632 = vmatprep.subr.bf16.mxu0 0
        %633 = vmatpush1.bf16.msra.mxu0 0
        %634 = vmatprep.subr.bf16.mxu0 0
        %635 = vmatpush1.bf16.msra.mxu0 0
        %636 = vmatprep.subr.bf16.mxu0 0
        %637 = vmatpush1.bf16.msra.mxu0 0
        %638 = vmatprep.subr.bf16.mxu0 0
        %639 = vmatpush1.bf16.msra.mxu0 0
        %640 = vmatprep.subr.bf16.mxu0 0
        %641 = vmatpush1.bf16.msra.mxu0 0
        %642 = vmatprep.subr.bf16.mxu0 0
        %643 = vmatpush1.bf16.msra.mxu0 0
        %644 = vmatprep.subr.bf16.mxu0 0
        %645 = vmatpush1.bf16.msra.mxu0 0
        %646 = vmatprep.subr.bf16.mxu0 0
        %647 = vmatpush1.bf16.msra.mxu0 0
        %648 = vmatprep.mubr.bf16.mxu0 0
        %649 = vmatmul.mubr.bf16.gmra.mrb[0].mxu0 %v563
        %v650 = vpop.f32.mrb[0].mxu0
        %v651 = vadd.f32 %v567, %v650
        %v652 = vpop.f32.mrb[0].mxu0
        %v653 = vpop.f32.mrb[0].mxu0
        %v654 = vpop.f32.mrb[0].mxu0
        %655 = vdwg.mxu0
        %656 = vst [vmem:[%s359] sm:$0xff] %v651
        %s657 = sand.u32 %s177, 1
        %s658 = scalar_lea.sflag [#allocation4], %s657
        %s659 = sand.u32 %s177, 1
        %s660 = smul.addr %s659, 8
        %s661 = scalar_lea.vmem [#allocation8], %s660
        // Predicated region
        $region53: #{tpu_custom_call.1} parent=39 // pred_check
          %p662 = pneg %p187
        $region54: #{tpu_custom_call.1} parent=39 // pred_check_branch
          %664 = sbr.rel (%p662) target = $region56
        $region55: #{tpu_custom_call.1} parent=39 // pred_region
          %s666 = ssub.s32 128, 128
          %667 = vsyncadd %s658, %s666
          %s668 = sadd.s32 %s30, %s29
          %s669 = smul.addr %s668, 128
          %s670 = scalar_lea.hbm %s5, %s669
          %s672 = sshll.u32 %s661, 4
          %s673 = int_to_ptr.vmem [resolvable:$true] %s672
          %675 = dma.vmem_to_hbm [thread:$0]  %s673, 128, %s670, %s658
        $region56: #{tpu_custom_call.1} parent=39 // pred_fallthru
          _
      $region40: #{tpu_custom_call.1} parent=5 // pred_fallthru
        _
      %p676 = scmp.le.s32.totalorder 2, %s20
      // Predicated region
      $region57: #{tpu_custom_call.1} parent=5 // pred_check
        %p677 = pneg %p676
      $region58: #{tpu_custom_call.1} parent=5 // pred_check_branch
        %679 = sbr.rel (%p677) target = $region60
      $region59: #{tpu_custom_call.1} parent=5 // pred_region
        %s680 = ssub.s32 %s20, 2
        // Predicated region
        $region61: #{tpu_custom_call.1} parent=59 // pred_check
          %p681 = pneg %p193
        $region62: #{tpu_custom_call.1} parent=59 // pred_check_branch
          %683 = sbr.rel (%p681) target = $region64
        $region63: #{tpu_custom_call.1} parent=59 // pred_region
          %s684 = sand.u32 %s178, 1
          %s685 = scalar_lea.sflag [#allocation4], %s684
          %s686 = sand.u32 %s178, 1
          %s687 = smul.addr %s686, 8
          %s688 = scalar_lea.vmem [#allocation8], %s687
          %689 = dma.done %s685, 128
        $region64: #{tpu_custom_call.1} parent=59 // pred_fallthru
          _
      $region60: #{tpu_custom_call.1} parent=5 // pred_fallthru
        _
    $region6: #{tpu_custom_call.1} parent=1 // loop_footer
      %s24 = sadd.s32 1, %s20
    $region7: #{tpu_custom_call.1} parent=1 // loop_footer_branch
      %19 = sbr.rel target = $region3
    $region8: #{tpu_custom_call.1} parent=1 // loop_exit
      _
    %690 = vsyncpa [#allocation3], 1
    %s691 = scalar_lea.sflag [#allocation3], 1
    %692 = vsyncpa %s691, 1
    %693 = vsyncpa [#allocation6], 1
    %s694 = scalar_lea.sflag [#allocation6], 1
    %695 = vsyncpa %s694, 1
    %696 = vsyncpa [#allocation4], 1
    %s697 = scalar_lea.sflag [#allocation4], 1
    %698 = vsyncpa %s697, 1

</llo_original>
